<compile_context>
chip_gen: v7x
topology: tpu7x:2x2x1
jax: 0.10.0
libtpu: 0.0.40
codegen_flags: <defaults>
</compile_context>

<pallas_src>
import functools
import math

import jax
import jax.numpy as jnp
from jax import lax
from jax.experimental import pallas as pl
from jax.experimental.pallas import tpu as pltpu


def conv_block_kernel(x_ref, w_ref, b_ref, pos_ref, o_ref, *, K, co_t, n_co):
    # x_ref:   (Cp, T)       lane-packed activations (whole sequences only)
    # w_ref:   (co_t, K*Cp)  tap-fused bf16 weights for this Cout tile
    # b_ref:   (co_t, 1)     bias
    # pos_ref: (1, T)        position of each lane inside its own sequence
    # o_ref:   (co_t, T)
    xb = x_ref[...]                       # f32
    Cp, _ = xb.shape
    pos = pos_ref[...]

    acc = None
    for k in range(K):                    # K is a small static constant -> unrolled
        s = K - 1 - k                     # causal shift for tap k
        if s == 0:
            tap = xb
        else:
            shifted = pltpu.roll(xb, shift=s, axis=1)            # XLU lane rotate
            # Zero the causal-pad region and cross-sequence / block wrap-ins.
            tap = jnp.where(pos >= s, shifted, jnp.zeros_like(shifted))
        # bf16 MXU operands, f32 accumulation; K chained matmuls, no im2col.
        p = jnp.dot(w_ref[:, k * Cp:(k + 1) * Cp],
                    tap.astype(jnp.bfloat16),
                    preferred_element_type=jnp.float32)
        acc = p if acc is None else acc + p

    acc = acc + b_ref[...].astype(jnp.float32)                   # (co_t, 1) broadcast

    # Residual rows for this Cout tile (Cin == Cout, so they live in the x block).
    if n_co == 1:
        xres = xb
    else:
        start = pl.multiple_of(pl.program_id(1) * co_t, co_t)
        xres = x_ref[pl.ds(start, co_t), :]

    out = jnp.maximum(acc, 0.0) + xres.astype(jnp.float32)       # ReLU + residual
    o_ref[...] = out.astype(o_ref.dtype)


def conv_block(x, w, b, *, lane_target=None, cout_tile=256):
    """x: (B, C, L) NCL, w: (Cout, Cin, K), b: (Cout,)."""
    B, C, L = x.shape
    Cout, Cin, K = w.shape
    assert Cout == C and Cin == C, "ConvBlock maps channels -> channels"

    # ---- tiling / padding decisions (wrapper-side layout plumbing only) ----
    Cp = -(-C // 8) * 8                                # sublane-aligned channels
    bt_unit = 128 // math.gcd(L, 128)                  # sequences per 128 lanes
    Bp = -(-B // bt_unit) * bt_unit                    # total lanes % 128 == 0

    if lane_target is None:                            # keep an x block around <= 4 MiB
        lane_target = max(128, min(8192, (4 * 2**20) // (Cp * 4)))
    bt = min(Bp, max(bt_unit, (lane_target // (bt_unit * L)) * bt_unit))
    while Bp % bt:                                     # bt_unit always divides Bp
        bt -= bt_unit
    T = bt * L                                         # lane width, multiple of 128
    n_bt = Bp // bt
    # TODO(synk): on v7x prefer n_bt >= 2 so both TensorCores get a grid slice.

    if Cp <= cout_tile or Cp % cout_tile:
        co_t, n_co = Cp, 1                             # small C: resident weights
    else:
        co_t, n_co = cout_tile, Cp // cout_tile        # large C: tile Cout on the grid

    # channel-major, lane-packed activations: (Cp, Bp*L)
    x2 = jnp.transpose(x, (1, 0, 2))                   # (C, B, L)
    if (Cp, Bp) != (C, B):
        x2 = jnp.pad(x2, ((0, Cp - C), (0, Bp - B), (0, 0)))
    x2 = x2.reshape(Cp, Bp * L)

    # tap-fused bf16 weights: w2[:, k*Cp + ci] == w[co, ci, k]
    w2 = jnp.transpose(w, (0, 2, 1))                   # (C, K, C)
    if Cp != C:
        w2 = jnp.pad(w2, ((0, Cp - C), (0, 0), (0, Cp - C)))
    w2 = w2.reshape(Cp, K * Cp).astype(jnp.bfloat16)

    b2 = jnp.pad(b.astype(jnp.float32), (0, Cp - C)).reshape(Cp, 1)

    # per-lane position inside its own sequence (tile boundaries are L-aligned,
    # so one T-wide row serves every batch tile; avoids in-kernel modulo).
    pos = jnp.tile(jnp.arange(L, dtype=jnp.int32), bt).reshape(1, T)

    # VMEM budget: double-buffered x/out blocks + resident w/b/pos + f32 temps.
    est = 4 * Cp * T * 4 + 4 * co_t * T * 4 + 2 * co_t * K * Cp * 2 + Cp * 8 + 4 * T
    vmem_limit = int(min(48 * 2**20, max(32 * 2**20, 2 * est)))

    kernel = functools.partial(conv_block_kernel, K=K, co_t=co_t, n_co=n_co)
    out2 = pl.pallas_call(
        kernel,
        out_shape=jax.ShapeDtypeStruct((Cp, Bp * L), x.dtype),
        grid=(n_bt, n_co),
        in_specs=[
            pl.BlockSpec((Cp, T), lambda i, j: (0, i)),           # activations
            pl.BlockSpec((co_t, K * Cp), lambda i, j: (j, 0)),    # weights (resident / Cout-tiled)
            pl.BlockSpec((co_t, 1), lambda i, j: (j, 0)),         # bias
            pl.BlockSpec((1, T), lambda i, j: (0, 0)),            # resident position row
        ],
        out_specs=pl.BlockSpec((co_t, T), lambda i, j: (j, i)),
        compiler_params=pltpu.CompilerParams(
            dimension_semantics=("parallel", "parallel"),
            vmem_limit_bytes=vmem_limit),
    )(x2, w2, b2, pos)

    return out2.reshape(Cp, Bp, L)[:C, :B].transpose(1, 0, 2)


def conv_block_ref(x, w, b):
    """Pure-JAX f32 reference: causal conv1d -> relu -> residual."""
    K = w.shape[-1]
    y = lax.conv_general_dilated(
        x, w, window_strides=(1,), padding=[(K - 1, 0)],
        dimension_numbers=("NCH", "OIH", "NCH"),
    ) + b[None, :, None]
    return jnp.maximum(y, 0.0) + x


if __name__ == "__main__":
    B, C, L, K = 2, 8, 16, 3

    key = jax.random.PRNGKey(0)
    kx, kw, kb = jax.random.split(key, 3)

    # Deterministic param init mimicking PyTorch Conv1d default (U[-1/sqrt(fan_in), +]).
    bound = 1.0 / (C * K) ** 0.5
    w = jax.random.uniform(kw, (C, C, K), jnp.float32, -bound, bound)
    b = jax.random.uniform(kb, (C,), jnp.float32, -bound, bound)
    x = jax.random.normal(kx, (B, C, L), jnp.float32)

    out = jax.block_until_ready(conv_block(x, w, b))
    ref = jax.block_until_ready(conv_block_ref(x, w, b))

    assert out.shape == (B, C, L)
    # bf16 MXU operands vs f32 reference -> relaxed tolerance.
    assert jnp.allclose(out, ref, atol=5e-2, rtol=5e-2), "mismatch vs reference"
    print("KERNEL_OK")
</pallas_src>

<mosaic_0001>
module attributes {stable_mosaic.version = 11 : i64} {
  func.func @conv_block_kernel(%arg0: i32, %arg1: i32, %arg2: memref<8x128xf32, #tpu.memory_space<vmem>>, %arg3: memref<8x24xbf16, #tpu.memory_space<vmem>>, %arg4: memref<8x1xf32, #tpu.memory_space<vmem>>, %arg5: memref<1x128xi32, #tpu.memory_space<vmem>>, %arg6: memref<8x128xf32, #tpu.memory_space<vmem>>) attributes {dimension_semantics = [#tpu.dimension_semantics<parallel>, #tpu.dimension_semantics<parallel>], iteration_bounds = array<i64: 1, 1>, scalar_prefetch = 0 : i64, scratch_operands = 0 : i64, tpu.core_type = #tpu.core_type<tc>, window_params = [{transform_indices = @transform_0, window_bounds = array<i64: 8, 128>}, {transform_indices = @transform_1, window_bounds = array<i64: 8, 24>}, {transform_indices = @transform_2, window_bounds = array<i64: 8, 1>}, {pipeline_mode = #tpu.pipeline_mode<synchronous>, transform_indices = @transform_3, window_bounds = array<i64: 1, 128>}, {transform_indices = @transform_4, window_bounds = array<i64: 8, 128>}]} {
    %c0 = arith.constant 0 : index
    %c0_0 = arith.constant 0 : index
    %0 = vector.load %arg2[%c0, %c0_0] : memref<8x128xf32, #tpu.memory_space<vmem>>, vector<8x128xf32>
    %c0_1 = arith.constant 0 : index
    %c0_2 = arith.constant 0 : index
    %1 = vector.load %arg5[%c0_1, %c0_2] : memref<1x128xi32, #tpu.memory_space<vmem>>, vector<1x128xi32>
    %c2_i32 = arith.constant 2 : i32
    %2 = tpu.dynamic_rotate %0 by %c2_i32 dim 1 : vector<8x128xf32>, i32 -> vector<8x128xf32>
    %c2_i32_3 = arith.constant 2 : i32
    %3 = vector.broadcast %c2_i32_3 : i32 to vector<1x128xi32>
    %4 = arith.cmpi sge, %1, %3 : vector<1x128xi32>
    %cst = arith.constant 0.000000e+00 : f32
    %5 = vector.broadcast %cst : f32 to vector<8x128xf32>
    %6 = vector.shape_cast %4 : vector<1x128xi1> to vector<1x128xi1>
    %7 = vector.broadcast %6 : vector<1x128xi1> to vector<8x128xi1>
    %8 = arith.select %7, %2, %5 : vector<8x128xi1>, vector<8x128xf32>
    %c0_4 = arith.constant 0 : index
    %c0_5 = arith.constant 0 : index
    %9 = vector.load %arg3[%c0_4, %c0_5] : memref<8x24xbf16, #tpu.memory_space<vmem>>, vector<8x8xbf16>
    %10 = arith.truncf %8 : vector<8x128xf32> to vector<8x128xbf16>
    %cst_6 = arith.constant dense<0.000000e+00> : vector<8x128xf32>
    %11 = tpu.matmul %9, %10, %cst_6 {dimension_numbers = #tpu.dot_dimension_numbers<[1], [0], [0], [1], [0, 0, 1, 1], [], []>} : vector<8x8xbf16>, vector<8x128xbf16>, vector<8x128xf32> -> vector<8x128xf32>
    %c1_i32 = arith.constant 1 : i32
    %12 = tpu.dynamic_rotate %0 by %c1_i32 dim 1 : vector<8x128xf32>, i32 -> vector<8x128xf32>
    %c1_i32_7 = arith.constant 1 : i32
    %13 = vector.broadcast %c1_i32_7 : i32 to vector<1x128xi32>
    %14 = arith.cmpi sge, %1, %13 : vector<1x128xi32>
    %cst_8 = arith.constant 0.000000e+00 : f32
    %15 = vector.broadcast %cst_8 : f32 to vector<8x128xf32>
    %16 = vector.shape_cast %14 : vector<1x128xi1> to vector<1x128xi1>
    %17 = vector.broadcast %16 : vector<1x128xi1> to vector<8x128xi1>
    %18 = arith.select %17, %12, %15 : vector<8x128xi1>, vector<8x128xf32>
    %c0_9 = arith.constant 0 : index
    %c8 = arith.constant 8 : index
    %19 = vector.load %arg3[%c0_9, %c8] : memref<8x24xbf16, #tpu.memory_space<vmem>>, vector<8x8xbf16>
    %20 = arith.truncf %18 : vector<8x128xf32> to vector<8x128xbf16>
    %cst_10 = arith.constant dense<0.000000e+00> : vector<8x128xf32>
    %21 = tpu.matmul %19, %20, %cst_10 {dimension_numbers = #tpu.dot_dimension_numbers<[1], [0], [0], [1], [0, 0, 1, 1], [], []>} : vector<8x8xbf16>, vector<8x128xbf16>, vector<8x128xf32> -> vector<8x128xf32>
    %22 = arith.addf %11, %21 : vector<8x128xf32>
    %c0_11 = arith.constant 0 : index
    %c16 = arith.constant 16 : index
    %23 = vector.load %arg3[%c0_11, %c16] : memref<8x24xbf16, #tpu.memory_space<vmem>>, vector<8x8xbf16>
    %24 = arith.truncf %0 : vector<8x128xf32> to vector<8x128xbf16>
    %cst_12 = arith.constant dense<0.000000e+00> : vector<8x128xf32>
    %25 = tpu.matmul %23, %24, %cst_12 {dimension_numbers = #tpu.dot_dimension_numbers<[1], [0], [0], [1], [0, 0, 1, 1], [], []>} : vector<8x8xbf16>, vector<8x128xbf16>, vector<8x128xf32> -> vector<8x128xf32>
    %26 = arith.addf %22, %25 : vector<8x128xf32>
    %c0_13 = arith.constant 0 : index
    %c0_14 = arith.constant 0 : index
    %27 = vector.load %arg4[%c0_13, %c0_14] : memref<8x1xf32, #tpu.memory_space<vmem>>, vector<8x1xf32>
    %28 = vector.broadcast %27 : vector<8x1xf32> to vector<8x128xf32>
    %29 = arith.addf %26, %28 : vector<8x128xf32>
    %cst_15 = arith.constant 0.000000e+00 : f32
    %30 = vector.broadcast %cst_15 : f32 to vector<8x128xf32>
    %31 = arith.maximumf %29, %30 : vector<8x128xf32>
    %32 = arith.addf %31, %0 : vector<8x128xf32>
    %c0_16 = arith.constant 0 : index
    %c0_17 = arith.constant 0 : index
    %33 = vector.load %arg6[%c0_16, %c0_17] : memref<8x128xf32, #tpu.memory_space<vmem>>, vector<8x128xf32>
    tpu.vector_store %arg6[%c0_16, %c0_17], %32 {strides = array<i32>} : memref<8x128xf32, #tpu.memory_space<vmem>>, vector<8x128xf32>,
    return
  }
  func.func @transform_0(%arg0: i32, %arg1: i32) -> (i32, i32) {
    %c0_i32 = arith.constant 0 : i32
    %c0_i32_0 = arith.constant 0 : i32
    return %c0_i32, %arg0 : i32, i32
  }
  func.func @transform_1(%arg0: i32, %arg1: i32) -> (i32, i32) {
    %c0_i32 = arith.constant 0 : i32
    %c0_i32_0 = arith.constant 0 : i32
    return %arg1, %c0_i32 : i32, i32
  }
  func.func @transform_2(%arg0: i32, %arg1: i32) -> (i32, i32) {
    %c0_i32 = arith.constant 0 : i32
    %c0_i32_0 = arith.constant 0 : i32
    return %arg1, %c0_i32 : i32, i32
  }
  func.func @transform_3(%arg0: i32, %arg1: i32) -> (i32, i32) {
    %c0_i32 = arith.constant 0 : i32
    %c0_i32_0 = arith.constant 0 : i32
    %c0_i32_1 = arith.constant 0 : i32
    return %c0_i32, %c0_i32_0 : i32, i32
  }
  func.func @transform_4(%arg0: i32, %arg1: i32) -> (i32, i32) {
    %c0_i32 = arith.constant 0 : i32
    return %arg1, %arg0 : i32, i32
  }
}

</mosaic_0001>

<llo_original>
// kernel: tpu_custom_call.1
$region0: #{tpu_custom_call.1}
  #allocation0 [shape = 'u32[]', space=smem, size = 0x4, offset = 0x4, fixed_abs, tag = 'smem constant byte address 0x4 - core index']
  #allocation1 [shape = 'u32[144,128]{1,0:T(1,128)}', space=vmem, size = 0x12000, scoped, tag = 'internal scratch']
  %s0 = inlined_call_operand.vmem [shape: f32[8,128], index: 0, kind: input, shape index: {}]
  %s1 = inlined_call_operand.vmem [shape: bf16[8,24], index: 1, kind: input, shape index: {}]
  %s2 = inlined_call_operand.vmem [shape: f32[8,1], index: 2, kind: input, shape index: {}]
  %s3 = inlined_call_operand.vmem [shape: s32[1,128], index: 3, kind: input, shape index: {}]
  %s4 = inlined_call_operand.hbm [shape: f32[8,128], index: 4, kind: output, shape index: {}]
  %s5 = sld [smem:[#allocation0]]
  $region26: #{tpu_custom_call.1} parent=0
    _
  %s7 = ssub.s32 1, %s5
  %s8 = scalar_select 0, %s7, %s5
  $region1: #{tpu_custom_call.1} parent=0
    #allocation2 [shape = 'u8[4096]{0}', space=vmem, size = 0x1000, scoped, tag = 'output window, operand 0, single buffered']
    #allocation3 [shape = 's32[1]{0}', space=sflag, size = 0x4, scoped, tag = 'scoped memory for tpu_custom_call.1']
    %9 = vsyncpa [#allocation3], 0
    // Predicated region
    $region2: #{tpu_custom_call.1} parent=1 // pred_check
      _
    $region3: #{tpu_custom_call.1} parent=1 // pred_check_branch
      %11 = sbr.rel (0) target = $region5
    $region4: #{tpu_custom_call.1} parent=1 // pred_region
      _
    $region5: #{tpu_custom_call.1} parent=1 // pred_fallthru
      _
    // Predicated region
    $region6: #{tpu_custom_call.1} parent=1 // pred_check
      _
    $region7: #{tpu_custom_call.1} parent=1 // pred_check_branch
      %13 = sbr.rel (0) target = $region9
    $region8: #{tpu_custom_call.1} parent=1 // pred_region
      _
    $region9: #{tpu_custom_call.1} parent=1 // pred_fallthru
      _
    // Predicated region
    $region10: #{tpu_custom_call.1} parent=1 // pred_check
      _
    $region11: #{tpu_custom_call.1} parent=1 // pred_check_branch
      %15 = sbr.rel (0) target = $region13
    $region12: #{tpu_custom_call.1} parent=1 // pred_region
      _
    $region13: #{tpu_custom_call.1} parent=1 // pred_fallthru
      _
    // Predicated region
    $region14: #{tpu_custom_call.1} parent=1 // pred_check
      _
    $region15: #{tpu_custom_call.1} parent=1 // pred_check_branch
      %17 = sbr.rel (0) target = $region17
    $region16: #{tpu_custom_call.1} parent=1 // pred_region
      _
    $region17: #{tpu_custom_call.1} parent=1 // pred_fallthru
      _
    %v19 = vld [vmem:[%s0] sm:$0xff]
    %v20 = vld [vmem:[%s3] sm:$0x1]
    %21 = vrot.lane.b32.xlu0 %v19, 2
    %v22 = vpop.permute.xlu0 %21
    %vm23 = vcmp.ge.s32.totalorder %v20, 2
    %v24 = vsel %vm23, 1, 0
    %v25 = vlaneseq
    %v26 = vshrl.u32 %v25, 7
    %v27 = vsub.s32 0, %v26
    %v28 = vrot.slane %v24, %v27
    %vm29 = vcmp.eq.s32.totalorder %v28, 1
    %v30 = vsel %vm29, %v22, 0.0
    %v31 = vld [vmem:[%s1] sm:$0xf]
    %v32 = vpack.c.bf16 %v30, %v30
    %33 = vrot.lane.b32.xlu0 %v19, 1
    %v34 = vpop.permute.xlu0 %33
    %vm35 = vcmp.ge.s32.totalorder %v20, 1
    %v36 = vsel %vm35, 1, 0
    %v37 = vlaneseq
    %v38 = vshrl.u32 %v37, 7
    %v39 = vsub.s32 0, %v38
    %v40 = vrot.slane %v36, %v39
    %vm41 = vcmp.eq.s32.totalorder %v40, 1
    %v42 = vsel %vm41, %v34, 0.0
    %v43 = vpack.c.bf16 %v42, %v42
    %v45 = vunpack.c.l.b16 %v31
    %v46 = vpack.c.b16 %v45, %v45
    %47 = vrot.lane.b32.xlu0 %v46, 120
    %v48 = vpop.permute.xlu0 %47
    %vm49 = vcmask 64512
    %v51 = vsel %vm49, %v48, 0
    %vm53 = vcmask 1043456
    %v55 = vsel %vm53, %v43, 0
    %57 = vmatprep.subr.bf16.mxu0 0
    %58 = vmatpush1.bf16.msra.mxu0 %v55
    %59 = vmatprep.subr.bf16.mxu0 0
    %60 = vmatpush1.bf16.msra.mxu0 0
    %61 = vmatprep.subr.bf16.mxu0 0
    %62 = vmatpush1.bf16.msra.mxu0 0
    %63 = vmatprep.subr.bf16.mxu0 0
    %64 = vmatpush1.bf16.msra.mxu0 0
    %65 = vmatprep.subr.bf16.mxu0 0
    %66 = vmatpush1.bf16.msra.mxu0 0
    %67 = vmatprep.subr.bf16.mxu0 0
    %68 = vmatpush1.bf16.msra.mxu0 0
    %69 = vmatprep.subr.bf16.mxu0 0
    %70 = vmatpush1.bf16.msra.mxu0 0
    %71 = vmatprep.subr.bf16.mxu0 0
    %72 = vmatpush1.bf16.msra.mxu0 0
    %73 = vmatprep.subr.bf16.mxu0 0
    %74 = vmatpush1.bf16.msra.mxu0 0
    %75 = vmatprep.subr.bf16.mxu0 0
    %76 = vmatpush1.bf16.msra.mxu0 0
    %77 = vmatprep.subr.bf16.mxu0 0
    %78 = vmatpush1.bf16.msra.mxu0 0
    %79 = vmatprep.subr.bf16.mxu0 0
    %80 = vmatpush1.bf16.msra.mxu0 0
    %81 = vmatprep.subr.bf16.mxu0 0
    %82 = vmatpush1.bf16.msra.mxu0 0
    %83 = vmatprep.subr.bf16.mxu0 0
    %84 = vmatpush1.bf16.msra.mxu0 0
    %85 = vmatprep.subr.bf16.mxu0 0
    %86 = vmatpush1.bf16.msra.mxu0 0
    %87 = vmatprep.subr.bf16.mxu0 0
    %88 = vmatpush1.bf16.msra.mxu0 0
    %89 = vmatprep.mubr.bf16.mxu0 0
    %90 = vmatmul.mubr.bf16.gmra.mrb[0].mxu0 %v51
    %v91 = vpop.f32.mrb[0].mxu0
    %v92 = vadd.f32 0.0, %v91
    %v93 = vpop.f32.mrb[0].mxu0
    %v94 = vpop.f32.mrb[0].mxu0
    %v95 = vpop.f32.mrb[0].mxu0
    %96 = vdwg.mxu0
    %v98 = vsel %vm49, %v31, 0
    %v101 = vsel %vm53, %v32, 0
    %103 = vmatprep.subr.bf16.mxu0 0
    %104 = vmatpush1.bf16.msra.mxu0 %v101
    %105 = vmatprep.subr.bf16.mxu0 0
    %106 = vmatpush1.bf16.msra.mxu0 0
    %107 = vmatprep.subr.bf16.mxu0 0
    %108 = vmatpush1.bf16.msra.mxu0 0
    %109 = vmatprep.subr.bf16.mxu0 0
    %110 = vmatpush1.bf16.msra.mxu0 0
    %111 = vmatprep.subr.bf16.mxu0 0
    %112 = vmatpush1.bf16.msra.mxu0 0
    %113 = vmatprep.subr.bf16.mxu0 0
    %114 = vmatpush1.bf16.msra.mxu0 0
    %115 = vmatprep.subr.bf16.mxu0 0
    %116 = vmatpush1.bf16.msra.mxu0 0
    %117 = vmatprep.subr.bf16.mxu0 0
    %118 = vmatpush1.bf16.msra.mxu0 0
    %119 = vmatprep.subr.bf16.mxu0 0
    %120 = vmatpush1.bf16.msra.mxu0 0
    %121 = vmatprep.subr.bf16.mxu0 0
    %122 = vmatpush1.bf16.msra.mxu0 0
    %123 = vmatprep.subr.bf16.mxu0 0
    %124 = vmatpush1.bf16.msra.mxu0 0
    %125 = vmatprep.subr.bf16.mxu0 0
    %126 = vmatpush1.bf16.msra.mxu0 0
    %127 = vmatprep.subr.bf16.mxu0 0
    %128 = vmatpush1.bf16.msra.mxu0 0
    %129 = vmatprep.subr.bf16.mxu0 0
    %130 = vmatpush1.bf16.msra.mxu0 0
    %131 = vmatprep.subr.bf16.mxu0 0
    %132 = vmatpush1.bf16.msra.mxu0 0
    %133 = vmatprep.subr.bf16.mxu0 0
    %134 = vmatpush1.bf16.msra.mxu0 0
    %135 = vmatprep.mubr.bf16.mxu0 0
    %136 = vmatmul.mubr.bf16.gmra.mrb[0].mxu0 %v98
    %v137 = vpop.f32.mrb[0].mxu0
    %v138 = vadd.f32 %v92, %v137
    %v139 = vpop.f32.mrb[0].mxu0
    %v140 = vpop.f32.mrb[0].mxu0
    %v141 = vpop.f32.mrb[0].mxu0
    %142 = vdwg.mxu0
    %v143 = vpack.c.bf16 %v19, %v19
    %144 = vrot.lane.b32.xlu0 %v46, 112
    %v145 = vpop.permute.xlu0 %144
    %v147 = vsel %vm49, %v145, 0
    %v150 = vsel %vm53, %v143, 0
    %152 = vmatprep.subr.bf16.mxu0 0
    %153 = vmatpush1.bf16.msra.mxu0 %v150
    %154 = vmatprep.subr.bf16.mxu0 0
    %155 = vmatpush1.bf16.msra.mxu0 0
    %156 = vmatprep.subr.bf16.mxu0 0
    %157 = vmatpush1.bf16.msra.mxu0 0
    %158 = vmatprep.subr.bf16.mxu0 0
    %159 = vmatpush1.bf16.msra.mxu0 0
    %160 = vmatprep.subr.bf16.mxu0 0
    %161 = vmatpush1.bf16.msra.mxu0 0
    %162 = vmatprep.subr.bf16.mxu0 0
    %163 = vmatpush1.bf16.msra.mxu0 0
    %164 = vmatprep.subr.bf16.mxu0 0
    %165 = vmatpush1.bf16.msra.mxu0 0
    %166 = vmatprep.subr.bf16.mxu0 0
    %167 = vmatpush1.bf16.msra.mxu0 0
    %168 = vmatprep.subr.bf16.mxu0 0
    %169 = vmatpush1.bf16.msra.mxu0 0
    %170 = vmatprep.subr.bf16.mxu0 0
    %171 = vmatpush1.bf16.msra.mxu0 0
    %172 = vmatprep.subr.bf16.mxu0 0
    %173 = vmatpush1.bf16.msra.mxu0 0
    %174 = vmatprep.subr.bf16.mxu0 0
    %175 = vmatpush1.bf16.msra.mxu0 0
    %176 = vmatprep.subr.bf16.mxu0 0
    %177 = vmatpush1.bf16.msra.mxu0 0
    %178 = vmatprep.subr.bf16.mxu0 0
    %179 = vmatpush1.bf16.msra.mxu0 0
    %180 = vmatprep.subr.bf16.mxu0 0
    %181 = vmatpush1.bf16.msra.mxu0 0
    %182 = vmatprep.subr.bf16.mxu0 0
    %183 = vmatpush1.bf16.msra.mxu0 0
    %184 = vmatprep.mubr.bf16.mxu0 0
    %185 = vmatmul.mubr.bf16.gmra.mrb[0].mxu0 %v147
    %v186 = vpop.f32.mrb[0].mxu0
    %v187 = vadd.f32 0.0, %v186
    %v188 = vpop.f32.mrb[0].mxu0
    %v189 = vpop.f32.mrb[0].mxu0
    %v190 = vpop.f32.mrb[0].mxu0
    %191 = vdwg.mxu0
    %v192 = vadd.f32 %v138, %v187
    %v193 = vld [vmem:[%s2] sm:$0xff]
    %195 = vset.pattern.permute.xlu0 0
    %196 = vperm.xlu0 %195, %v193
    %v197 = vpop.permute.xlu0 %196
    %v199 = vadd.f32 %v192, %v197
    %v200 = vmax.f32 %v199, 0.0
    %v201 = vadd.f32 %v200, %v19
    %202 = vst [vmem:[#allocation2] sm:$0xff] %v201
    // Predicated region
    $region18: #{tpu_custom_call.1} parent=1 // pred_check
      _
    $region19: #{tpu_custom_call.1} parent=1 // pred_check_branch
      %204 = sbr.rel (0) target = $region21
    $region20: #{tpu_custom_call.1} parent=1 // pred_region
      %s206 = ssub.s32 128, 128
      %207 = vsyncadd [#allocation3], %s206
      %s209 = sshll.u32 [#allocation2], 4
      %s210 = int_to_ptr.vmem [resolvable:$true] %s209
      %212 = dma.vmem_to_hbm [thread:$0]  %s210, 128, %s4, [#allocation3]
    $region21: #{tpu_custom_call.1} parent=1 // pred_fallthru
      _
    // Predicated region
    $region22: #{tpu_custom_call.1} parent=1 // pred_check
      _
    $region23: #{tpu_custom_call.1} parent=1 // pred_check_branch
      %214 = sbr.rel (0) target = $region25
    $region24: #{tpu_custom_call.1} parent=1 // pred_region
      %215 = dma.done [#allocation3], 128
    $region25: #{tpu_custom_call.1} parent=1 // pred_fallthru
      _
    %216 = vsyncpa [#allocation3], 1

</llo_original>
